<compile_context>
chip_gen: v7x
topology: tpu7x:2x2x1
jax: 0.10.0
libtpu: 0.0.40
codegen_flags: <defaults>
</compile_context>

<pallas_src>
import math
import functools

import jax
import jax.numpy as jnp
from jax import lax
from jax.experimental import pallas as pl
from jax.experimental.pallas import tpu as pltpu


_MATMUL_DTYPE = jnp.bfloat16        # MXU input dtype (f32 accumulation everywhere)


@functools.lru_cache(maxsize=None)
def _vmem_limit_bytes():
    """Per-chip scoped-VMEM request: 3/4 of physical VMEM (headroom for the
    compiler's own scratch).  ~48 MiB on v7x, ~96 MiB on v5e/v6e."""
    cap = 64 * 1024 * 1024          # conservative default = v7x physical VMEM
    try:
        cap = int(getattr(pltpu.get_tpu_info(), "vmem_capacity_bytes", cap) or cap)
    except Exception:
        pass
    return (cap * 3) // 4


def _pick_tile(dim, preferred, multiple):
    """Largest divisor of `dim` that is <= `preferred` and a multiple of
    `multiple` (8 for sublane axes, 128 for lane axes).  Dims <= preferred use
    the full dimension (always a legal block)."""
    if dim <= preferred:
        return dim
    for t in range(preferred, multiple - 1, -1):
        if dim % t == 0 and t % multiple == 0:
            return t
    # TODO(synk): awkward (e.g. prime) dims fall back to the full dimension;
    # a bounded-VMEM version needs pl.cdiv grids + in-kernel masking.
    return dim


# ---------------------------------------------------------------------------
# Kernel 1: bias-free linear projection, tiled over (batch, Dout, S, Din).
#   x_ref : (tm, tk)   activation tile (bf16)
#   w_ref : (tn, tk)   PyTorch-layout [Dout, Din] weight tile (bf16)
#   o_ref : (tm, tn)   output tile
#   acc   : (tm, tn)   f32 accumulator across the inner Din axis
# ---------------------------------------------------------------------------
def _linear_kernel(x_ref, w_ref, o_ref, acc_ref):
    kk = pl.program_id(3)

    @pl.when(kk == 0)
    def _():
        acc_ref[...] = jnp.zeros_like(acc_ref)

    # y = x @ w.T without a transpose: contract the LAST dim of both operands.
    acc_ref[...] += lax.dot_general(
        x_ref[...], w_ref[...],
        dimension_numbers=(((1,), (1,)), ((), ())),
        preferred_element_type=jnp.float32,
    )

    @pl.when(kk == pl.num_programs(3) - 1)
    def _():
        o_ref[...] = acc_ref[...].astype(o_ref.dtype)


def linear_nobias(x, w, out_dtype=None):
    """y[b] = x[b] @ w.T.  x: [B, S, Din], w: [Dout, Din] -> [B, S, Dout]."""
    B, S, Din = x.shape
    Dout = w.shape[0]
    out_dtype = x.dtype if out_dtype is None else out_dtype

    tm = _pick_tile(S, 256, 8)        # activation rows per step
    tn = _pick_tile(Dout, 512, 128)   # output columns (weight rows) per step
    tk = _pick_tile(Din, 512, 128)    # contraction chunk per step
    grid = (B, Dout // tn, S // tm, Din // tk)

    return pl.pallas_call(
        _linear_kernel,
        out_shape=jax.ShapeDtypeStruct((B, S, Dout), out_dtype),
        grid_spec=pltpu.PrefetchScalarGridSpec(
            num_scalar_prefetch=0,
            grid=grid,
            in_specs=[
                pl.BlockSpec((None, tm, tk), lambda b, j, i, kk: (b, i, kk)),
                pl.BlockSpec((tn, tk), lambda b, j, i, kk: (j, kk)),
            ],
            out_specs=pl.BlockSpec((None, tm, tn), lambda b, j, i, kk: (b, i, j)),
            scratch_shapes=[pltpu.VMEM((tm, tn), jnp.float32)],
        ),
        compiler_params=pltpu.CompilerParams(
            dimension_semantics=("parallel", "parallel", "parallel", "arbitrary"),
            vmem_limit_bytes=_vmem_limit_bytes(),
        ),
    )(x, w)


# ---------------------------------------------------------------------------
# Kernel 2 (fast path): flash-style all-head attention for one (batch, q-tile),
# KV tiled along an inner "arbitrary" grid axis with online softmax.
#   q_ref : (tq,  d_model)  bf16 (projected queries, heads along last dim)
#   k_ref : (tkv, d_model)  bf16
#   v_ref : (tkv, d_model)  bf16
#   o_ref : (tq,  d_model)  context with heads already concatenated
#   m_sc/l_sc : (H, tq, 1)  f32 running max / denominator
#   acc_sc    : (tq, d_model) f32 running context accumulator
# ---------------------------------------------------------------------------
def _flash_mha_kernel(q_ref, k_ref, v_ref, o_ref, m_sc, l_sc, acc_sc,
                      *, num_heads, d_k, scale):
    kv = pl.program_id(2)

    @pl.when(kv == 0)
    def _():
        m_sc[...] = jnp.full_like(m_sc, -jnp.inf)
        l_sc[...] = jnp.zeros_like(l_sc)
        acc_sc[...] = jnp.zeros_like(acc_sc)

    q = q_ref[...]
    k = k_ref[...]
    v = v_ref[...]

    for h in range(num_heads):                      # static, unrolled head loop
        lo = h * d_k
        qh = q[:, lo:lo + d_k] * scale              # fold 1/sqrt(d_k) into q tile
        kh = k[:, lo:lo + d_k]
        vh = v[:, lo:lo + d_k]

        # scores = (Qh * scale) @ Kh^T  (contract last dims, f32 accumulate)
        s = lax.dot_general(
            qh, kh, dimension_numbers=(((1,), (1,)), ((), ())),
            preferred_element_type=jnp.float32,
        )
        # TODO(synk): optional attention mask (mask=None in this forward) not wired in.

        m_prev = m_sc[h]
        m_new = jnp.maximum(m_prev, jnp.max(s, axis=-1, keepdims=True))
        alpha = jnp.exp(m_prev - m_new)
        p = jnp.exp(s - m_new)
        l_sc[h] = alpha * l_sc[h] + jnp.sum(p, axis=-1, keepdims=True)
        # write each head's PV result directly into its accumulator slice
        acc_sc[:, lo:lo + d_k] = alpha * acc_sc[:, lo:lo + d_k] + jnp.dot(
            p.astype(v.dtype), vh, preferred_element_type=jnp.float32)
        m_sc[h] = m_new

    @pl.when(kv == pl.num_programs(2) - 1)
    def _():
        # exact reciprocal at finalize: once per row per head, cheap.
        for h in range(num_heads):
            lo = h * d_k
            inv_l = 1.0 / l_sc[h]
            o_ref[:, lo:lo + d_k] = (acc_sc[:, lo:lo + d_k] * inv_l).astype(o_ref.dtype)


def attention_flash(q, k, v, num_heads, *, out_dtype=None, q_tile=256, kv_tile=512):
    """q: [B, Sq, d_model] (projected), k/v: [B, Skv, d_model] ->
    context [B, Sq, d_model] with heads concatenated.  No attn-weights output."""
    B, Sq, Dm = q.shape
    Skv = k.shape[1]
    assert Dm % num_heads == 0
    d_k = Dm // num_heads
    out_dtype = q.dtype if out_dtype is None else out_dtype
    scale = 1.0 / math.sqrt(d_k)

    tq = _pick_tile(Sq, q_tile, 8)
    # v7x has 2 TensorCores sharded over "parallel" grid axes: keep >= 2
    # parallel steps when possible.
    if B * (Sq // tq) < 2 and tq % 16 == 0:
        tq //= 2
    tkv = _pick_tile(Skv, kv_tile, 8)
    grid = (B, Sq // tq, Skv // tkv)

    kernel = functools.partial(_flash_mha_kernel,
                               num_heads=num_heads, d_k=d_k, scale=scale)

    return pl.pallas_call(
        kernel,
        out_shape=jax.ShapeDtypeStruct((B, Sq, Dm), out_dtype),
        grid_spec=pltpu.PrefetchScalarGridSpec(
            num_scalar_prefetch=0,
            grid=grid,
            in_specs=[
                pl.BlockSpec((None, tq, Dm), lambda b, i, kv: (b, i, 0)),
                pl.BlockSpec((None, tkv, Dm), lambda b, i, kv: (b, kv, 0)),
                pl.BlockSpec((None, tkv, Dm), lambda b, i, kv: (b, kv, 0)),
            ],
            out_specs=pl.BlockSpec((None, tq, Dm), lambda b, i, kv: (b, i, 0)),
            scratch_shapes=[
                pltpu.VMEM((num_heads, tq, 1), jnp.float32),   # running max m
                pltpu.VMEM((num_heads, tq, 1), jnp.float32),   # running denom l
                pltpu.VMEM((tq, Dm), jnp.float32),             # ctx accumulator
            ],
        ),
        compiler_params=pltpu.CompilerParams(
            dimension_semantics=("parallel", "parallel", "arbitrary"),
            vmem_limit_bytes=_vmem_limit_bytes(),
        ),
    )(q, k, v)


# ---------------------------------------------------------------------------
# Kernel 3 (attn-weights path): full-KV attention that also emits the
# [H, tq, Skv] softmax weights (the module's second return value).
# ---------------------------------------------------------------------------
def _mha_attn_weights_kernel(q_ref, k_ref, v_ref, o_ref, attn_ref,
                             *, num_heads, d_k, scale):
    q = q_ref[...]
    k = k_ref[...]
    v = v_ref[...]
    for h in range(num_heads):                      # static, unrolled head loop
        lo = h * d_k
        qh = q[:, lo:lo + d_k] * scale
        kh = k[:, lo:lo + d_k]
        vh = v[:, lo:lo + d_k]

        s = lax.dot_general(
            qh, kh, dimension_numbers=(((1,), (1,)), ((), ())),
            preferred_element_type=jnp.float32,
        )
        # TODO(synk): optional attention mask (mask=None in this forward) not wired in.
        s = s - jnp.max(s, axis=-1, keepdims=True)
        e = jnp.exp(s)
        p = e * (1.0 / jnp.sum(e, axis=-1, keepdims=True))   # exact reciprocal

        attn_ref[h] = p.astype(attn_ref.dtype)
        # per-head direct store into the output block (no concat, no spills)
        o_ref[:, lo:lo + d_k] = jnp.dot(
            p.astype(v.dtype), vh, preferred_element_type=jnp.float32
        ).astype(o_ref.dtype)


def attention_with_weights(q, k, v, num_heads, *, attn_dtype=jnp.bfloat16,
                           out_dtype=None, q_tile=128):
    B, Sq, Dm = q.shape
    Skv = k.shape[1]
    assert Dm % num_heads == 0
    d_k = Dm // num_heads
    out_dtype = q.dtype if out_dtype is None else out_dtype
    scale = 1.0 / math.sqrt(d_k)

    tq = _pick_tile(Sq, q_tile, 8)   # small tq: the attn tile is H*tq*Skv bytes
    grid = (B, Sq // tq)

    kernel = functools.partial(_mha_attn_weights_kernel,
                               num_heads=num_heads, d_k=d_k, scale=scale)

    ctx, attn = pl.pallas_call(
        kernel,
        out_shape=(
            jax.ShapeDtypeStruct((B, Sq, Dm), out_dtype),
            jax.ShapeDtypeStruct((B, num_heads, Sq, Skv), attn_dtype),
        ),
        grid_spec=pltpu.PrefetchScalarGridSpec(
            num_scalar_prefetch=0,
            grid=grid,
            in_specs=[
                pl.BlockSpec((None, tq, Dm), lambda b, i: (b, i, 0)),
                pl.BlockSpec((None, Skv, Dm), lambda b, i: (b, 0, 0)),
                pl.BlockSpec((None, Skv, Dm), lambda b, i: (b, 0, 0)),
            ],
            out_specs=(
                pl.BlockSpec((None, tq, Dm), lambda b, i: (b, i, 0)),
                pl.BlockSpec((None, num_heads, tq, Skv), lambda b, i: (b, 0, i, 0)),
            ),
        ),
        compiler_params=pltpu.CompilerParams(
            dimension_semantics=("parallel", "parallel"),
            vmem_limit_bytes=_vmem_limit_bytes(),
        ),
    )(q, k, v)
    return ctx, attn


# ---------------------------------------------------------------------------
# Full module forward (no XLA reshapes/transposes between kernels).
# ---------------------------------------------------------------------------
def multi_head_attention(Q, K, V, params, num_heads, *, return_attn=True,
                         attn_dtype=jnp.bfloat16):
    """Forward pass of the PyTorch MultiHeadAttention module (mask=None).

    return_attn=False is the fast path (flash-style KV tiling, no
    [B, H, Sq, Skv] writeback).  return_attn=True matches the module's
    (output, attn) contract; attn is stored as `attn_dtype` (bf16 default)."""
    out_dtype = Q.dtype
    # cast activations & weights to bf16 at the kernel boundary (MXU inputs)
    Wq = params["W_q"].astype(_MATMUL_DTYPE)
    Wk = params["W_k"].astype(_MATMUL_DTYPE)
    Wv = params["W_v"].astype(_MATMUL_DTYPE)
    Wo = params["W_o"].astype(_MATMUL_DTYPE)

    if Q is K and K is V:
        # self-attention: one stacked QKV projection reads the activations
        # from HBM once instead of three times.
        x = Q.astype(_MATMUL_DTYPE)
        qkv = linear_nobias(x, jnp.concatenate([Wq, Wk, Wv], axis=0))
        q, k, v = jnp.split(qkv, 3, axis=-1)
    else:
        q = linear_nobias(Q.astype(_MATMUL_DTYPE), Wq)   # [B, Sq,  d_model] bf16
        k = linear_nobias(K.astype(_MATMUL_DTYPE), Wk)   # [B, Skv, d_model] bf16
        v = linear_nobias(V.astype(_MATMUL_DTYPE), Wv)   # [B, Skv, d_model] bf16

    if return_attn:
        ctx, attn = attention_with_weights(q, k, v, num_heads, attn_dtype=attn_dtype)
    else:
        ctx = attention_flash(q, k, v, num_heads)
        attn = None

    out = linear_nobias(ctx, Wo, out_dtype=out_dtype)    # [B, Sq, d_model] f32
    return out, attn


# ---------------------------------------------------------------------------
# Pure-JAX f32 reference (mirrors the PyTorch forward) for a correctness check.
# ---------------------------------------------------------------------------
def reference_mha(Q, K, V, params, num_heads):
    B, S, d_model = Q.shape
    d_k = d_model // num_heads
    q = Q @ params["W_q"].T
    k = K @ params["W_k"].T
    v = V @ params["W_v"].T
    q = q.reshape(B, S, num_heads, d_k).transpose(0, 2, 1, 3)
    k = k.reshape(B, S, num_heads, d_k).transpose(0, 2, 1, 3)
    v = v.reshape(B, S, num_heads, d_k).transpose(0, 2, 1, 3)
    scores = jnp.einsum("bhqd,bhkd->bhqk", q, k) / math.sqrt(d_k)
    attn = jax.nn.softmax(scores, axis=-1)
    out = jnp.einsum("bhqk,bhkd->bhqd", attn, v)
    out = out.transpose(0, 2, 1, 3).reshape(B, S, d_model)
    out = out @ params["W_o"].T
    return out, attn


if __name__ == "__main__":
    batch, seq_len, d_model, num_heads = 2, 8, 32, 4

    key = jax.random.PRNGKey(0)
    kq, kk, kv, kwq, kwk, kwv, kwo = jax.random.split(key, 7)

    Q = jax.random.normal(kq, (batch, seq_len, d_model), dtype=jnp.float32)
    K = jax.random.normal(kk, (batch, seq_len, d_model), dtype=jnp.float32)
    V = jax.random.normal(kv, (batch, seq_len, d_model), dtype=jnp.float32)

    # Deterministic synthetic weights, PyTorch nn.Linear layout [out, in].
    init_scale = 1.0 / math.sqrt(d_model)
    params = {
        "W_q": jax.random.uniform(kwq, (d_model, d_model), jnp.float32,
                                  -init_scale, init_scale),
        "W_k": jax.random.uniform(kwk, (d_model, d_model), jnp.float32,
                                  -init_scale, init_scale),
        "W_v": jax.random.uniform(kwv, (d_model, d_model), jnp.float32,
                                  -init_scale, init_scale),
        "W_o": jax.random.uniform(kwo, (d_model, d_model), jnp.float32,
                                  -init_scale, init_scale),
    }

    # Module-faithful path (returns attention weights).
    out, attn = multi_head_attention(Q, K, V, params, num_heads, return_attn=True)
    out = jax.block_until_ready(out)
    attn = jax.block_until_ready(attn)

    # Fast path (flash-style, no attention-weights writeback).
    out_fast, attn_fast = multi_head_attention(Q, K, V, params, num_heads,
                                               return_attn=False)
    out_fast = jax.block_until_ready(out_fast)

    ref_out, ref_attn = reference_mha(Q, K, V, params, num_heads)
    assert out.shape == (batch, seq_len, d_model)
    assert attn is not None and attn.shape == (batch, num_heads, seq_len, seq_len)
    assert attn_fast is None and out_fast.shape == out.shape
    # bf16 MXU inputs -> loosened tolerances vs the f32 reference
    assert jnp.allclose(out, ref_out, atol=5e-2, rtol=5e-2)
    assert jnp.allclose(out_fast, ref_out, atol=5e-2, rtol=5e-2)
    assert jnp.allclose(attn.astype(jnp.float32), ref_attn, atol=2e-2, rtol=2e-2)

    print("KERNEL_OK")
</pallas_src>

<mosaic_0001>
module attributes {stable_mosaic.version = 11 : i64} {
  func.func @_linear_kernel(%arg0: i32, %arg1: i32, %arg2: i32, %arg3: i32, %arg4: memref<1x8x32xbf16, #tpu.memory_space<vmem>>, %arg5: memref<32x32xbf16, #tpu.memory_space<vmem>>, %arg6: memref<1x8x32xbf16, #tpu.memory_space<vmem>>, %arg7: memref<8x32xf32, #tpu.memory_space<vmem>>) attributes {dimension_semantics = [#tpu.dimension_semantics<parallel>, #tpu.dimension_semantics<parallel>, #tpu.dimension_semantics<parallel>, #tpu.dimension_semantics<arbitrary>], iteration_bounds = array<i64: 2, 1, 1, 1>, scalar_prefetch = 0 : i64, scratch_operands = 1 : i64, tpu.core_type = #tpu.core_type<tc>, window_params = [{transform_indices = @transform_0, window_bounds = array<i64: 1, 8, 32>}, {transform_indices = @transform_1, window_bounds = array<i64: 32, 32>}, {transform_indices = @transform_2, window_bounds = array<i64: 1, 8, 32>}]} {
    %c0_i32 = arith.constant 0 : i32
    %0 = arith.cmpi eq, %arg3, %c0_i32 : i32
    %1 = arith.extui %0 : i1 to i32
    %c0_i32_0 = arith.constant 0 : i32
    %2 = arith.cmpi ne, %1, %c0_i32_0 : i32
    scf.if %2 {
      %cst_11 = arith.constant 0.000000e+00 : f32
      %13 = vector.broadcast %cst_11 : f32 to vector<8x32xf32>
      %c0_12 = arith.constant 0 : index
      %c0_13 = arith.constant 0 : index
      %14 = vector.load %arg7[%c0_12, %c0_13] : memref<8x32xf32, #tpu.memory_space<vmem>>, vector<8x32xf32>
      tpu.vector_store %arg7[%c0_12, %c0_13], %13 {strides = array<i32>} : memref<8x32xf32, #tpu.memory_space<vmem>>, vector<8x32xf32>,
    } else {
    }
    %c0 = arith.constant 0 : index
    %c0_1 = arith.constant 0 : index
    %3 = vector.load %arg7[%c0, %c0_1] : memref<8x32xf32, #tpu.memory_space<vmem>>, vector<8x32xf32>
    %c0_2 = arith.constant 0 : index
    %c0_3 = arith.constant 0 : index
    %c0_4 = arith.constant 0 : index
    %4 = vector.load %arg4[%c0_2, %c0_3, %c0_4] : memref<1x8x32xbf16, #tpu.memory_space<vmem>>, vector<1x8x32xbf16>
    %5 = vector.shape_cast %4 : vector<1x8x32xbf16> to vector<8x32xbf16>
    %c0_5 = arith.constant 0 : index
    %c0_6 = arith.constant 0 : index
    %6 = vector.load %arg5[%c0_5, %c0_6] : memref<32x32xbf16, #tpu.memory_space<vmem>>, vector<32x32xbf16>
    %cst = arith.constant dense<0.000000e+00> : vector<8x32xf32>
    %7 = tpu.matmul %5, %6, %cst {dimension_numbers = #tpu.dot_dimension_numbers<[1], [1], [0], [0], [0, 0, 1, 0], [], []>} : vector<8x32xbf16>, vector<32x32xbf16>, vector<8x32xf32> -> vector<8x32xf32>
    %8 = arith.addf %3, %7 : vector<8x32xf32>
    %c0_7 = arith.constant 0 : index
    %c0_8 = arith.constant 0 : index
    %9 = vector.load %arg7[%c0_7, %c0_8] : memref<8x32xf32, #tpu.memory_space<vmem>>, vector<8x32xf32>
    tpu.vector_store %arg7[%c0_7, %c0_8], %8 {strides = array<i32>} : memref<8x32xf32, #tpu.memory_space<vmem>>, vector<8x32xf32>,
    %c0_i32_9 = arith.constant 0 : i32
    %10 = arith.cmpi eq, %arg3, %c0_i32_9 : i32
    %11 = arith.extui %10 : i1 to i32
    %c0_i32_10 = arith.constant 0 : i32
    %12 = arith.cmpi ne, %11, %c0_i32_10 : i32
    scf.if %12 {
      %c0_11 = arith.constant 0 : index
      %c0_12 = arith.constant 0 : index
      %13 = vector.load %arg7[%c0_11, %c0_12] : memref<8x32xf32, #tpu.memory_space<vmem>>, vector<8x32xf32>
      %14 = arith.truncf %13 : vector<8x32xf32> to vector<8x32xbf16>
      %c0_13 = arith.constant 0 : index
      %c0_14 = arith.constant 0 : index
      %c0_15 = arith.constant 0 : index
      %15 = vector.load %arg6[%c0_13, %c0_14, %c0_15] : memref<1x8x32xbf16, #tpu.memory_space<vmem>>, vector<1x8x32xbf16>
      %16 = vector.shape_cast %15 : vector<1x8x32xbf16> to vector<8x32xbf16>
      %17 = vector.shape_cast %14 : vector<8x32xbf16> to vector<1x8x32xbf16>
      tpu.vector_store %arg6[%c0_13, %c0_14, %c0_15], %17 {strides = array<i32>} : memref<1x8x32xbf16, #tpu.memory_space<vmem>>, vector<1x8x32xbf16>,
    } else {
    }
    return
  }
  func.func @transform_0(%arg0: i32, %arg1: i32, %arg2: i32, %arg3: i32) -> (i32, i32, i32) {
    %c0_i32 = arith.constant 0 : i32
    return %arg0, %arg2, %arg3 : i32, i32, i32
  }
  func.func @transform_1(%arg0: i32, %arg1: i32, %arg2: i32, %arg3: i32) -> (i32, i32) {
    %c0_i32 = arith.constant 0 : i32
    return %arg1, %arg3 : i32, i32
  }
  func.func @transform_2(%arg0: i32, %arg1: i32, %arg2: i32, %arg3: i32) -> (i32, i32, i32) {
    %c0_i32 = arith.constant 0 : i32
    return %arg0, %arg2, %arg1 : i32, i32, i32
  }
}

</mosaic_0001>

<llo_original>
// kernel: tpu_custom_call.1
$region0: #{tpu_custom_call.1}
  #allocation0 [shape = 'u32[]', space=smem, size = 0x4, offset = 0x4, fixed_abs, tag = 'smem constant byte address 0x4 - core index']
  #allocation1 [shape = 'u32[144,128]{1,0:T(1,128)}', space=vmem, size = 0x12000, scoped, tag = 'internal scratch']
  #allocation2 [shape = 'f32[8,32]{1,0:T(8,128)}', space=vmem, size = 0x1000, scoped, tag = 'scratch operand']
  %s0 = inlined_call_operand.hbm [shape: bf16[2,8,32], index: 0, kind: input, shape index: {}]
  %s1 = inlined_call_operand.hbm [shape: bf16[32,32], index: 1, kind: input, shape index: {}]
  %s2 = inlined_call_operand.hbm [shape: bf16[2,8,32], index: 2, kind: output, shape index: {}]
  %s3 = sld [smem:[#allocation0]]
  $region57: #{tpu_custom_call.1} parent=0
    _
  %s5 = ssub.s32 1, %s3
  %s6 = scalar_select 0, %s5, %s3
  $region1: #{tpu_custom_call.1} parent=0
    #allocation3 [shape = 'u8[4096]{0}', space=vmem, size = 0x1000, scoped, tag = 'input window, operand 0']
    #allocation4 [shape = 's32[2]{0}', space=sflag, size = 0x8, scoped, tag = 'scoped memory for tpu_custom_call.1']
    #allocation5 [shape = 's32[2]{0}', space=sflag, size = 0x8, scoped, tag = 'scoped memory for tpu_custom_call.1']
    #allocation6 [shape = 'u8[8192]{0}', space=vmem, size = 0x2000, scoped, tag = 'input window, operand 1, single buffered']
    #allocation7 [shape = 's32[1]{0}', space=sflag, size = 0x4, scoped, tag = 'scoped memory for tpu_custom_call.1']
    #allocation8 [shape = 'u8[4096]{0}', space=vmem, size = 0x1000, scoped, tag = 'output window, operand 0']
    %7 = vsyncpa [#allocation4], 0
    %s8 = scalar_lea.sflag [#allocation4], 1
    %9 = vsyncpa %s8, 0
    %10 = vsyncpa [#allocation7], 0
    %11 = vsyncpa [#allocation5], 0
    %s12 = scalar_lea.sflag [#allocation5], 1
    %13 = vsyncpa %s12, 0
    loop: start=0, step=1, limit=4
    $region2: #{tpu_custom_call.1} parent=1 // loop_pre_header
      _
    $region3: #{tpu_custom_call.1} parent=1 // loop_header
      %s15 = sphi 0, %s19
      %p16 = scmp.ge.s32.totalorder %s15, 4
      %s22 = sphi 0, %s48
      %s23 = sphi 0, %s44
      %s24 = sphi 0, %s40
      %s25 = sphi 0, %s36
      %s26 = sphi 0, %s22
      %s27 = sphi 0, %s23
      %s28 = sphi 0, %s24
      %s29 = sphi 0, %s25
      %s30 = sphi 0, %s26
      %s31 = sphi 0, %s27
      %s32 = sphi 0, %s28
      %s33 = sphi 0, %s29
      %s55 = sphi 0, %s57
      %s58 = sphi 0, %s55
      %s59 = sphi 0, %s58
      %s75 = sphi 0, %s59
      %s83 = sphi 0, %s85
      %s86 = sphi 0, %s83
      %s87 = sphi 0, %s86
      %s103 = sphi 0, %s87
      %s113 = sphi 0, %s115
      %s116 = sphi 0, %s113
      %s117 = sphi 0, %s116
      %s133 = sphi 0, %s117
    $region4: #{tpu_custom_call.1} parent=1 // loop_header_branch
      %18 = sbr.rel (%p16) target = $region8
    $region5: #{tpu_custom_call.1} parent=1 // loop_body
      %s20 = ssub.s32 %s15, 1
      %s21 = ssub.s32 %s15, 2
      %s34 = sadd.s32 1, %s25
      %p35 = scmp.ge.s32.totalorder %s34, 1
      %s36 = scalar_select %p35, 0, %s34
      %s37 = sadd.s32 1, %s24
      %s38 = scalar_select %p35, %s37, %s24
      %p39 = scmp.ge.s32.totalorder %s38, 1
      %s40 = scalar_select %p39, 0, %s38
      %s41 = sadd.s32 1, %s23
      %s42 = scalar_select %p39, %s41, %s23
      %p43 = scmp.ge.s32.totalorder %s42, 1
      %s44 = scalar_select %p43, 0, %s42
      %s45 = sadd.s32 1, %s22
      %s46 = scalar_select %p43, %s45, %s22
      %p47 = scmp.ge.s32.totalorder %s46, 2
      %s48 = scalar_select %p47, 0, %s46
      %s49 = ssub.s32 %s22, %s48
      %s50 = ssub.s32 %s24, %s40
      %s51 = sor.u32 %s49, %s50
      %s52 = ssub.s32 %s25, %s36
      %s53 = sor.u32 %s51, %s52
      %p54 = scmp.eq.s32.totalorder %s53, 0
      %s56 = sadd.s32 %s55, 1
      %s57 = scalar_select %p54, %s55, %s56
      %p60 = pneg %p54
      %p61 = scmp.eq.s32.totalorder %s15, 1
      %p62 = por %p60, %p61
      %p63 = scmp.ne.s32.totalorder %s55, %s58
      %p64 = scmp.eq.s32.totalorder %s15, 0
      %p65 = por %p63, %p64
      %p66 = scmp.ne.s32.totalorder %s55, %s58
      %p67 = scmp.eq.s32.totalorder %s20, 1
      %p68 = por %p66, %p67
      %p69 = scmp.ne.s32.totalorder %s58, %s59
      %p70 = scmp.eq.s32.totalorder %s20, 0
      %p71 = por %p69, %p70
      %p72 = scmp.ne.s32.totalorder %s58, %s59
      %p73 = scmp.eq.s32.totalorder %s21, 1
      %p74 = por %p72, %p73
      %p76 = scmp.ne.s32.totalorder %s59, %s75
      %p77 = scmp.eq.s32.totalorder %s21, 0
      %p78 = por %p76, %p77
      %s79 = ssub.s32 %s23, %s44
      %s80 = ssub.s32 %s25, %s36
      %s81 = sor.u32 %s79, %s80
      %p82 = scmp.eq.s32.totalorder %s81, 0
      %s84 = sadd.s32 %s83, 1
      %s85 = scalar_select %p82, %s83, %s84
      %p88 = pneg %p82
      %p89 = scmp.eq.s32.totalorder %s15, 1
      %p90 = por %p88, %p89
      %p91 = scmp.ne.s32.totalorder %s83, %s86
      %p92 = scmp.eq.s32.totalorder %s15, 0
      %p93 = por %p91, %p92
      %p94 = scmp.ne.s32.totalorder %s83, %s86
      %p95 = scmp.eq.s32.totalorder %s20, 1
      %p96 = por %p94, %p95
      %p97 = scmp.ne.s32.totalorder %s86, %s87
      %p98 = scmp.eq.s32.totalorder %s20, 0
      %p99 = por %p97, %p98
      %p100 = scmp.ne.s32.totalorder %s86, %s87
      %p101 = scmp.eq.s32.totalorder %s21, 1
      %p102 = por %p100, %p101
      %p104 = scmp.ne.s32.totalorder %s87, %s103
      %p105 = scmp.eq.s32.totalorder %s21, 0
      %p106 = por %p104, %p105
      %s107 = ssub.s32 %s22, %s48
      %s108 = ssub.s32 %s24, %s40
      %s109 = sor.u32 %s107, %s108
      %s110 = ssub.s32 %s23, %s44
      %s111 = sor.u32 %s109, %s110
      %p112 = scmp.eq.s32.totalorder %s111, 0
      %s114 = sadd.s32 %s113, 1
      %s115 = scalar_select %p112, %s113, %s114
      %p118 = pneg %p112
      %p119 = scmp.eq.s32.totalorder %s15, 1
      %p120 = por %p118, %p119
      %p121 = scmp.ne.s32.totalorder %s113, %s116
      %p122 = scmp.eq.s32.totalorder %s15, 0
      %p123 = por %p121, %p122
      %p124 = scmp.ne.s32.totalorder %s113, %s116
      %p125 = scmp.eq.s32.totalorder %s20, 1
      %p126 = por %p124, %p125
      %p127 = scmp.ne.s32.totalorder %s116, %s117
      %p128 = scmp.eq.s32.totalorder %s20, 0
      %p129 = por %p127, %p128
      %p130 = scmp.ne.s32.totalorder %s116, %s117
      %p131 = scmp.eq.s32.totalorder %s21, 1
      %p132 = por %p130, %p131
      %p134 = scmp.ne.s32.totalorder %s117, %s133
      %p135 = scmp.eq.s32.totalorder %s21, 0
      %p136 = por %p134, %p135
      %p137 = scmp.le.s32.totalorder 1, %s15
      %p138 = scmp.lt.s32.totalorder %s15, 3
      %p139 = pnand %p137, %p138
      %p140 = pneg %p139
      // Predicated region
      $region9: #{tpu_custom_call.1} parent=5 // pred_check
        _
      $region10: #{tpu_custom_call.1} parent=5 // pred_check_branch
        %142 = sbr.rel (%p139) target = $region12
      $region11: #{tpu_custom_call.1} parent=5 // pred_region
        %s143 = ssub.s32 %s15, 1
        // Predicated region
        $region13: #{tpu_custom_call.1} parent=11 // pred_check
          %p144 = pneg %p99
        $region14: #{tpu_custom_call.1} parent=11 // pred_check_branch
          %146 = sbr.rel (%p144) target = $region16
        $region15: #{tpu_custom_call.1} parent=11 // pred_region
          %s147 = smul.u32 4, %s27
          %s149 = ssub.s32 256, 256
          %150 = vsyncadd [#allocation7], %s149
          %s151 = sadd.s32 %s29, %s147
          %s152 = smul.addr %s151, 64
          %s153 = scalar_lea.hbm %s1, %s152
          %s154 = sshll.u32 [#allocation6], 4
          %s155 = int_to_ptr.vmem [resolvable:$true] %s154
          %160 = dma.hbm_to_vmem [thread:$0]  %s153, 256, %s155, [#allocation7], 64, 64, 4
        $region16: #{tpu_custom_call.1} parent=11 // pred_fallthru
          _
      $region12: #{tpu_custom_call.1} parent=5 // pred_fallthru
        _
      %p161 = scmp.lt.s32.totalorder %s15, 2
      // Predicated region
      $region17: #{tpu_custom_call.1} parent=5 // pred_check
        %p162 = pneg %p161
      $region18: #{tpu_custom_call.1} parent=5 // pred_check_branch
        %164 = sbr.rel (%p162) target = $region20
      $region19: #{tpu_custom_call.1} parent=5 // pred_region
        // Predicated region
        $region21: #{tpu_custom_call.1} parent=19 // pred_check
          %p165 = pneg %p65
        $region22: #{tpu_custom_call.1} parent=19 // pred_check_branch
          %167 = sbr.rel (%p165) target = $region24
        $region23: #{tpu_custom_call.1} parent=19 // pred_region
          %s168 = sand.u32 %s55, 1
          %s169 = scalar_lea.sflag [#allocation4], %s168
          %s170 = sand.u32 %s55, 1
          %s171 = smul.addr %s170, 4
          %s172 = scalar_lea.vmem [#allocation3], %s171
          %s174 = ssub.s32 64, 64
          %175 = vsyncadd %s169, %s174
          %s176 = sadd.s32 %s25, %s24
          %s177 = sadd.s32 %s176, %s22
          %s178 = smul.addr %s177, 64
          %s179 = scalar_lea.hbm %s0, %s178
          %s181 = sshll.u32 %s172, 4
          %s182 = int_to_ptr.vmem [resolvable:$true] %s181
          %184 = dma.hbm_to_vmem [thread:$0]  %s179, 64, %s182, %s169
        $region24: #{tpu_custom_call.1} parent=19 // pred_fallthru
          _
      $region20: #{tpu_custom_call.1} parent=5 // pred_fallthru
        _
      %p185 = scmp.le.s32.totalorder 1, %s15
      %p186 = scmp.lt.s32.totalorder %s15, 3
      %p187 = pnand %p185, %p186
      %p188 = pneg %p187
      // Predicated region
      $region25: #{tpu_custom_call.1} parent=5 // pred_check
        _
      $region26: #{tpu_custom_call.1} parent=5 // pred_check_branch
        %190 = sbr.rel (%p187) target = $region28
      $region27: #{tpu_custom_call.1} parent=5 // pred_region
        %s191 = ssub.s32 %s15, 1
        %s192 = sand.u32 %s58, 1
        %s193 = scalar_lea.sflag [#allocation4], %s192
        %s194 = sand.u32 %s58, 1
        %s195 = smul.addr %s194, 4
        %s196 = scalar_lea.vmem [#allocation3], %s195
        // Predicated region
        $region29: #{tpu_custom_call.1} parent=27 // pred_check
          %p197 = pneg %p71
        $region30: #{tpu_custom_call.1} parent=27 // pred_check_branch
          %199 = sbr.rel (%p197) target = $region32
        $region31: #{tpu_custom_call.1} parent=27 // pred_region
          %200 = dma.done %s193, 64
        $region32: #{tpu_custom_call.1} parent=27 // pred_fallthru
          _
        // Predicated region
        $region33: #{tpu_custom_call.1} parent=27 // pred_check
          %p201 = pneg %p99
        $region34: #{tpu_custom_call.1} parent=27 // pred_check_branch
          %203 = sbr.rel (%p201) target = $region36
        $region35: #{tpu_custom_call.1} parent=27 // pred_region
          %204 = dma.done [#allocation7], 256
        $region36: #{tpu_custom_call.1} parent=27 // pred_fallthru
          _
        %s205 = sand.u32 %s58, 1
        %s206 = scalar_lea.sflag [#allocation4], %s205
        %s207 = sand.u32 %s58, 1
        %s208 = smul.addr %s207, 4
        %s209 = scalar_lea.vmem [#allocation3], %s208
        %p210 = pneg %p71
        %p211 = pneg %p68
        %p212 = pneg %p99
        %p213 = pneg %p96
        %p214 = pneg %p129
        %p215 = pneg %p126
        %s216 = sand.u32 %s116, 1
        %s217 = scalar_lea.sflag [#allocation5], %s216
        %s218 = sand.u32 %s116, 1
        %s219 = smul.addr %s218, 4
        %s220 = scalar_lea.vmem [#allocation8], %s219
        %s221 = smul.u32 4, %s27
        %p223 = scmp.eq.s32.totalorder %s29, 0
        // Predicated region
        $region37: #{tpu_custom_call.1} parent=27 // pred_check
          %p224 = pneg %p223
        $region38: #{tpu_custom_call.1} parent=27 // pred_check_branch
          %226 = sbr.rel (%p224) target = $region40
        $region39: #{tpu_custom_call.1} parent=27 // pred_region
          %vm227 = vcmask 261120
          %228 = vst.msk [vmem:[#allocation2] sm:$0xff] %vm227, 0.0
        $region40: #{tpu_custom_call.1} parent=27 // pred_fallthru
          _
        %v229 = vld [vmem:[#allocation2] sm:$0xff]
        %v230 = vld [vmem:[%s196] sm:$0xf]
        %v231 = vld [vmem:[#allocation6] sm:$0xf]
        %v232 = vld [vmem:[#allocation6 + $0x4] sm:$0xf]
        %v233 = vld [vmem:[#allocation6 + $0x8] sm:$0xf]
        %v234 = vld [vmem:[#allocation6 + $0xc] sm:$0xf]
        %v239 = vunpack.c.l.b16 %v231
        %v240 = vunpack.c.l.b16 %v232
        %v241 = vunpack.c.l.b16 %v233
        %v242 = vunpack.c.l.b16 %v234
        %v243 = vpack.c.b16 %v240, %v239
        %v244 = vpack.c.b16 %v242, %v241
        %vm245 = vcmask 261120
        %v247 = vsel %vm245, %v230, 0
        %v250 = vsel %vm245, %v243, 0
        %v253 = vsel %vm245, %v244, 0
        %255 = vmatprep.subr.bf16.mxu0 0
        %256 = vmatpush1.bf16.xpose.msra.mxu0 %v250
        %257 = vmatprep.subr.bf16.mxu0 0
        %258 = vmatpush1.bf16.xpose.msra.mxu0 %v253
        %259 = vmatprep.subr.bf16.mxu0 0
        %260 = vmatpush1.bf16.xpose.msra.mxu0 0
        %261 = vmatprep.subr.bf16.mxu0 0
        %262 = vmatpush1.bf16.xpose.msra.mxu0 0
        %263 = vmatprep.subr.bf16.mxu0 0
        %264 = vmatpush1.bf16.xpose.msra.mxu0 0
        %265 = vmatprep.subr.bf16.mxu0 0
        %266 = vmatpush1.bf16.xpose.msra.mxu0 0
        %267 = vmatprep.subr.bf16.mxu0 0
        %268 = vmatpush1.bf16.xpose.msra.mxu0 0
        %269 = vmatprep.subr.bf16.mxu0 0
        %270 = vmatpush1.bf16.xpose.msra.mxu0 0
        %271 = vmatprep.subr.bf16.mxu0 0
        %272 = vmatpush1.bf16.xpose.msra.mxu0 0
        %273 = vmatprep.subr.bf16.mxu0 0
        %274 = vmatpush1.bf16.xpose.msra.mxu0 0
        %275 = vmatprep.subr.bf16.mxu0 0
        %276 = vmatpush1.bf16.xpose.msra.mxu0 0
        %277 = vmatprep.subr.bf16.mxu0 0
        %278 = vmatpush1.bf16.xpose.msra.mxu0 0
        %279 = vmatprep.subr.bf16.mxu0 0
        %280 = vmatpush1.bf16.xpose.msra.mxu0 0
        %281 = vmatprep.subr.bf16.mxu0 0
        %282 = vmatpush1.bf16.xpose.msra.mxu0 0
        %283 = vmatprep.subr.bf16.mxu0 0
        %284 = vmatpush1.bf16.xpose.msra.mxu0 0
        %285 = vmatprep.subr.bf16.mxu0 0
        %286 = vmatpush1.bf16.xpose.msra.mxu0 0
        %287 = vmatprep.mubr.bf16.mxu0 0
        %288 = vmatmul.mubr.bf16.gmra.mrb[0].mxu0 %v247
        %v289 = vpop.f32.mrb[0].mxu0
        %v290 = vadd.f32 0.0, %v289
        %v291 = vpop.f32.mrb[0].mxu0
        %v292 = vpop.f32.mrb[0].mxu0
        %v293 = vpop.f32.mrb[0].mxu0
        %294 = vdwg.mxu0
        %v295 = vadd.f32 %v229, %v290
        %296 = vst.msk [vmem:[#allocation2] sm:$0xff] %vm245, %v295
        // Predicated region
        $region41: #{tpu_custom_call.1} parent=27 // pred_check
          %p297 = pneg %p223
        $region42: #{tpu_custom_call.1} parent=27 // pred_check_branch
          %299 = sbr.rel (%p297) target = $region44
        $region43: #{tpu_custom_call.1} parent=27 // pred_region
          %v300 = vld [vmem:[#allocation2] sm:$0xff]
          %v301 = vpack.c.bf16 %v300, %v300
          %vm302 = vcmask 257024
          %303 = vst.msk [vmem:[%s220] sm:$0xf] %vm302, %v301
        $region44: #{tpu_custom_call.1} parent=27 // pred_fallthru
          _
        %s304 = sand.u32 %s116, 1
        %s305 = scalar_lea.sflag [#allocation5], %s304
        %s306 = sand.u32 %s116, 1
        %s307 = smul.addr %s306, 4
        %s308 = scalar_lea.vmem [#allocation8], %s307
        // Predicated region
        $region45: #{tpu_custom_call.1} parent=27 // pred_check
          %p309 = pneg %p126
        $region46: #{tpu_custom_call.1} parent=27 // pred_check_branch
          %311 = sbr.rel (%p309) target = $region48
        $region47: #{tpu_custom_call.1} parent=27 // pred_region
          %s313 = ssub.s32 64, 64
          %314 = vsyncadd %s305, %s313
          %s315 = sadd.s32 %s27, %s28
          %s316 = sadd.s32 %s315, %s26
          %s317 = smul.addr %s316, 64
          %s318 = scalar_lea.hbm %s2, %s317
          %s320 = sshll.u32 %s308, 4
          %s321 = int_to_ptr.vmem [resolvable:$true] %s320
          %323 = dma.vmem_to_hbm [thread:$0]  %s321, 64, %s318, %s305
        $region48: #{tpu_custom_call.1} parent=27 // pred_fallthru
          _
      $region28: #{tpu_custom_call.1} parent=5 // pred_fallthru
        _
      %p324 = scmp.le.s32.totalorder 2, %s15
      // Predicated region
      $region49: #{tpu_custom_call.1} parent=5 // pred_check
        %p325 = pneg %p324
      $region50: #{tpu_custom_call.1} parent=5 // pred_check_branch
        %327 = sbr.rel (%p325) target = $region52
      $region51: #{tpu_custom_call.1} parent=5 // pred_region
        %s328 = ssub.s32 %s15, 2
        // Predicated region
        $region53: #{tpu_custom_call.1} parent=51 // pred_check
          %p329 = pneg %p132
        $region54: #{tpu_custom_call.1} parent=51 // pred_check_branch
          %331 = sbr.rel (%p329) target = $region56
        $region55: #{tpu_custom_call.1} parent=51 // pred_region
          %s332 = sand.u32 %s117, 1
          %s333 = scalar_lea.sflag [#allocation5], %s332
          %s334 = sand.u32 %s117, 1
          %s335 = smul.addr %s334, 4
          %s336 = scalar_lea.vmem [#allocation8], %s335
          %337 = dma.done %s333, 64
        $region56: #{tpu_custom_call.1} parent=51 // pred_fallthru
          _
      $region52: #{tpu_custom_call.1} parent=5 // pred_fallthru
        _
    $region6: #{tpu_custom_call.1} parent=1 // loop_footer
      %s19 = sadd.s32 1, %s15
    $region7: #{tpu_custom_call.1} parent=1 // loop_footer_branch
      %14 = sbr.rel target = $region3
    $region8: #{tpu_custom_call.1} parent=1 // loop_exit
      _
    %338 = vsyncpa [#allocation4], 1
    %s339 = scalar_lea.sflag [#allocation4], 1
    %340 = vsyncpa %s339, 1
    %341 = vsyncpa [#allocation7], 1
    %342 = vsyncpa [#allocation5], 1
    %s343 = scalar_lea.sflag [#allocation5], 1
    %344 = vsyncpa %s343, 1

</llo_original>
